<compile_context>
chip_gen: v7x
topology: tpu7x:2x2x1
jax: 0.10.0
libtpu: 0.0.40
codegen_flags: <defaults>
</compile_context>

<pallas_src>
import jax
import jax.numpy as jnp
from jax.experimental import pallas as pl
from jax.experimental.pallas import tpu as pltpu

K = 3      # kernel_size (module default)
PAD = 1    # padding     (module default)


def _make_kernel(W, HW):
    def kernel(x_ref, pln_ref, pw_ref, b1_ref, b2_ref, out_ref):
        # x_ref  : (1, NB*Cin, HW)   input rows = (n_local, c), lanes = h*W + w
        # pln_ref: (6, NB*Cin, HW)   masked/folded depthwise weight planes
        #                            [0..2] = 1xK taps (x[w-1], x[w], x[w+1])
        #                            [3..5] = Kx1 taps (BN1 scale folded)
        # pw_ref : (NB*Cout, NB*Cin) block-diag pointwise weights (BN2 scale folded)
        # b1_ref : (NB*Cin, 1)       folded BN1 shift
        # b2_ref : (NB*Cout, 1)      folded BN2 shift
        # out_ref: (1, NB*Cout, HW)
        x = x_ref[0]                                        # (NB*Cin, HW)

        # ---- 1xK depthwise conv along W: shifted-add on the lane axis.
        # Zero-padding boundaries + per-channel taps are baked into the planes.
        t1 = (pltpu.roll(x, 1, axis=1) * pln_ref[0]          # x[w-1]
              + x * pln_ref[1]                               # x[w]
              + pltpu.roll(x, HW - 1, axis=1) * pln_ref[2])  # x[w+1]

        # ---- Kx1 depthwise conv along H: shift by a whole row (W lanes).
        t2 = (pltpu.roll(t1, W, axis=1) * pln_ref[3]          # t1[h-1]
              + t1 * pln_ref[4]                               # t1[h]
              + pltpu.roll(t1, HW - W, axis=1) * pln_ref[5])  # t1[h+1]

        # ---- BN1 shift + ReLU (scale already folded into planes 3..5)
        y = jnp.maximum(t2 + b1_ref[...], 0.0)               # (NB*Cin, HW)

        # ---- 1x1 pointwise conv as one MXU matmul (BN2 scale folded),
        #      then BN2 shift + ReLU, lane-dense 256-wide store.
        z = jnp.dot(pw_ref[...], y, preferred_element_type=jnp.float32)
        out_ref[0] = jnp.maximum(z + b2_ref[...], 0.0)

    return kernel


def asym_dwsep_conv(x_nchw, w_dw1, w_dw2, w_pw, bn1, bn2, eps=1e-5):
    """x_nchw: (N, Cin, H, W)
       w_dw1 : (Cin, 1, 1, K)    depthwise 1xK
       w_dw2 : (Cin, 1, K, 1)    depthwise Kx1
       w_pw  : (Cout, Cin, 1, 1) pointwise
       bn1/bn2: (gamma, beta, running_mean, running_var)  (eval-mode BN)"""
    N, Cin, H, W = x_nchw.shape
    Cout = w_pw.shape[0]
    HW = H * W
    f32 = jnp.float32

    # ---- batch blocking: largest divisor of N that keeps grid >= 2 (v7x has
    # 2 TensorCores sharded over the parallel grid axis); capped for VMEM.
    nb = 1
    for d in range(1, min(N, 64) + 1):
        if N % d == 0 and (N // d >= 2 or N < 2):
            nb = d
    G = N // nb

    # ---- raw parameters ----
    w1 = w_dw1[:, 0, 0, :].astype(f32)    # (Cin, K) taps along W
    w2 = w_dw2[:, 0, :, 0].astype(f32)    # (Cin, K) taps along H
    pw = w_pw[:, :, 0, 0].astype(f32)     # (Cout, Cin)

    g1, be1, m1, v1 = [a.astype(f32) for a in bn1]
    g2, be2, m2, v2 = [a.astype(f32) for a in bn2]
    s1 = g1 / jnp.sqrt(v1 + eps)          # (Cin,)
    b1 = be1 - m1 * s1                    # (Cin,)
    s2 = g2 / jnp.sqrt(v2 + eps)          # (Cout,)
    b2 = be2 - m2 * s2                    # (Cout,)

    # ---- wrapper-side constant folding (zero kernel cost) ----
    # Boundary masks for the circular rolls on the flattened (h, w) lane axis:
    # the wrapped / cross-row lanes are exactly the zero-padding positions.
    j = jnp.arange(HW)
    mask_l = (j % W != 0).astype(f32)           # x[w-1] valid
    mask_r = (j % W != W - 1).astype(f32)       # x[w+1] valid
    mask_u = (j >= W).astype(f32)               # t1[h-1] valid
    mask_d = (j < (H - 1) * W).astype(f32)      # t1[h+1] valid
    ones = jnp.ones((HW,), f32)

    planes = jnp.stack([
        w1[:, 0:1] * mask_l[None, :],                 # 1xK tap on x[w-1]
        w1[:, 1:2] * ones[None, :],                   # 1xK tap on x[w]
        w1[:, 2:3] * mask_r[None, :],                 # 1xK tap on x[w+1]
        (s1 * w2[:, 0])[:, None] * mask_u[None, :],   # Kx1 tap on t1[h-1] (BN1 scale folded)
        (s1 * w2[:, 1])[:, None] * ones[None, :],     # Kx1 tap on t1[h]
        (s1 * w2[:, 2])[:, None] * mask_d[None, :],   # Kx1 tap on t1[h+1]
    ], axis=0)                                        # (6, Cin, HW)
    planes = jnp.tile(planes, (1, nb, 1))             # (6, nb*Cin, HW)

    pw_bd = jnp.kron(jnp.eye(nb, dtype=f32), pw * s2[:, None])   # (nb*Cout, nb*Cin)
    b1c = jnp.tile(b1[:, None], (nb, 1))              # (nb*Cin, 1)
    b2c = jnp.tile(b2[:, None], (nb, 1))              # (nb*Cout, 1)

    # Pure reshape (no transpose / extra HBM pass): rows = (n_local, c).
    x3 = x_nchw.astype(f32).reshape(G, nb * Cin, HW)

    out = pl.pallas_call(
        _make_kernel(W, HW),
        out_shape=jax.ShapeDtypeStruct((G, nb * Cout, HW), f32),
        grid_spec=pltpu.PrefetchScalarGridSpec(
            num_scalar_prefetch=0,
            grid=(G,),
            in_specs=[
                pl.BlockSpec((1, nb * Cin, HW), lambda i: (i, 0, 0)),      # x
                pl.BlockSpec((6, nb * Cin, HW), lambda i: (0, 0, 0)),      # planes (resident)
                pl.BlockSpec((nb * Cout, nb * Cin), lambda i: (0, 0)),     # pointwise (VMEM -> MXU)
                pl.BlockSpec((nb * Cin, 1), lambda i: (0, 0)),             # b1
                pl.BlockSpec((nb * Cout, 1), lambda i: (0, 0)),            # b2
            ],
            out_specs=pl.BlockSpec((1, nb * Cout, HW), lambda i: (i, 0, 0)),
        ),
        compiler_params=pltpu.CompilerParams(
            dimension_semantics=("parallel",),
            vmem_limit_bytes=32 * 1024 * 1024,
        ),
    )(x3, planes, pw_bd, b1c, b2c)

    return out.reshape(N, Cout, H, W)


def reference(x_nchw, w_dw1, w_dw2, w_pw, bn1, bn2, eps=1e-5):
    """Pure-jnp NCHW reference mirroring the PyTorch forward (eval-mode BN)."""
    N, Cin, H, W = x_nchw.shape
    xp = jnp.pad(x_nchw, ((0, 0), (0, 0), (0, 0), (PAD, PAD)))
    t1 = jnp.zeros((N, Cin, H, W), jnp.float32)
    for kw in range(K):
        t1 = t1 + xp[:, :, :, kw:kw + W] * w_dw1[:, 0, 0, kw][None, :, None, None]
    t1p = jnp.pad(t1, ((0, 0), (0, 0), (PAD, PAD), (0, 0)))
    t2 = jnp.zeros((N, Cin, H, W), jnp.float32)
    for kh in range(K):
        t2 = t2 + t1p[:, :, kh:kh + H, :] * w_dw2[:, 0, kh, 0][None, :, None, None]
    g1, be1, m1, v1 = bn1
    y = (t2 - m1[None, :, None, None]) * (g1 / jnp.sqrt(v1 + eps))[None, :, None, None] \
        + be1[None, :, None, None]
    y = jnp.maximum(y, 0.0)
    y2 = jnp.einsum('nchw,oc->nohw', y, w_pw[:, :, 0, 0])
    g2, be2, m2, v2 = bn2
    z = (y2 - m2[None, :, None, None]) * (g2 / jnp.sqrt(v2 + eps))[None, :, None, None] \
        + be2[None, :, None, None]
    return jnp.maximum(z, 0.0)


if __name__ == "__main__":
    N, Cin, Cout, H, W = 2, 4, 8, 16, 16

    key = jax.random.PRNGKey(0)
    keys = jax.random.split(key, 12)

    x = jax.random.normal(keys[0], (N, Cin, H, W), jnp.float32)
    # parameter shapes match nn.Conv2d weights (bias=False)
    w_dw1 = 0.3 * jax.random.normal(keys[1], (Cin, 1, 1, K), jnp.float32)    # depthwise 1xK
    w_dw2 = 0.3 * jax.random.normal(keys[2], (Cin, 1, K, 1), jnp.float32)    # depthwise Kx1
    w_pw = 0.3 * jax.random.normal(keys[3], (Cout, Cin, 1, 1), jnp.float32)  # pointwise

    # non-trivial eval-mode BatchNorm state to exercise the BN folding
    bn1 = (1.0 + 0.1 * jax.random.normal(keys[4], (Cin,), jnp.float32),
           0.1 * jax.random.normal(keys[5], (Cin,), jnp.float32),
           0.1 * jax.random.normal(keys[6], (Cin,), jnp.float32),
           1.0 + 0.1 * jnp.abs(jax.random.normal(keys[7], (Cin,), jnp.float32)))
    bn2 = (1.0 + 0.1 * jax.random.normal(keys[8], (Cout,), jnp.float32),
           0.1 * jax.random.normal(keys[9], (Cout,), jnp.float32),
           0.1 * jax.random.normal(keys[10], (Cout,), jnp.float32),
           1.0 + 0.1 * jnp.abs(jax.random.normal(keys[11], (Cout,), jnp.float32)))

    out = jax.block_until_ready(asym_dwsep_conv(x, w_dw1, w_dw2, w_pw, bn1, bn2))
    ref = reference(x, w_dw1, w_dw2, w_pw, bn1, bn2)

    assert out.shape == (N, Cout, H, W)
    assert jnp.allclose(out, ref, rtol=1e-4, atol=1e-5), (
        "mismatch vs reference: max abs err = "
        + str(float(jnp.max(jnp.abs(out - ref)))))

    print("KERNEL_OK")
</pallas_src>

<mosaic_0001>
module attributes {stable_mosaic.version = 11 : i64} {
  func.func @kernel(%arg0: i32, %arg1: memref<1x4x256xf32, #tpu.memory_space<vmem>>, %arg2: memref<6x4x256xf32, #tpu.memory_space<vmem>>, %arg3: memref<8x4xf32, #tpu.memory_space<vmem>>, %arg4: memref<4x1xf32, #tpu.memory_space<vmem>>, %arg5: memref<8x1xf32, #tpu.memory_space<vmem>>, %arg6: memref<1x8x256xf32, #tpu.memory_space<vmem>>) attributes {dimension_semantics = [#tpu.dimension_semantics<parallel>], iteration_bounds = array<i64: 2>, scalar_prefetch = 0 : i64, scratch_operands = 0 : i64, tpu.core_type = #tpu.core_type<tc>, window_params = [{transform_indices = @transform_0, window_bounds = array<i64: 1, 4, 256>}, {pipeline_mode = #tpu.pipeline_mode<synchronous>, transform_indices = @transform_1, window_bounds = array<i64: 6, 4, 256>}, {pipeline_mode = #tpu.pipeline_mode<synchronous>, transform_indices = @transform_2, window_bounds = array<i64: 8, 4>}, {pipeline_mode = #tpu.pipeline_mode<synchronous>, transform_indices = @transform_3, window_bounds = array<i64: 4, 1>}, {pipeline_mode = #tpu.pipeline_mode<synchronous>, transform_indices = @transform_4, window_bounds = array<i64: 8, 1>}, {transform_indices = @transform_5, window_bounds = array<i64: 1, 8, 256>}]} {
    %c0 = arith.constant 0 : index
    %c0_0 = arith.constant 0 : index
    %c0_1 = arith.constant 0 : index
    %0 = vector.load %arg1[%c0, %c0_0, %c0_1] : memref<1x4x256xf32, #tpu.memory_space<vmem>>, vector<1x4x256xf32>
    %1 = vector.shape_cast %0 : vector<1x4x256xf32> to vector<4x256xf32>
    %c1_i32 = arith.constant 1 : i32
    %2 = tpu.dynamic_rotate %1 by %c1_i32 dim 1 : vector<4x256xf32>, i32 -> vector<4x256xf32>
    %c0_2 = arith.constant 0 : index
    %c0_3 = arith.constant 0 : index
    %c0_4 = arith.constant 0 : index
    %3 = vector.load %arg2[%c0_2, %c0_3, %c0_4] : memref<6x4x256xf32, #tpu.memory_space<vmem>>, vector<1x4x256xf32>
    %4 = vector.shape_cast %3 : vector<1x4x256xf32> to vector<4x256xf32>
    %5 = arith.mulf %2, %4 : vector<4x256xf32>
    %c1 = arith.constant 1 : index
    %c0_5 = arith.constant 0 : index
    %c0_6 = arith.constant 0 : index
    %6 = vector.load %arg2[%c1, %c0_5, %c0_6] : memref<6x4x256xf32, #tpu.memory_space<vmem>>, vector<1x4x256xf32>
    %7 = vector.shape_cast %6 : vector<1x4x256xf32> to vector<4x256xf32>
    %8 = arith.mulf %1, %7 : vector<4x256xf32>
    %9 = arith.addf %5, %8 : vector<4x256xf32>
    %c255_i32 = arith.constant 255 : i32
    %10 = tpu.dynamic_rotate %1 by %c255_i32 dim 1 : vector<4x256xf32>, i32 -> vector<4x256xf32>
    %c2 = arith.constant 2 : index
    %c0_7 = arith.constant 0 : index
    %c0_8 = arith.constant 0 : index
    %11 = vector.load %arg2[%c2, %c0_7, %c0_8] : memref<6x4x256xf32, #tpu.memory_space<vmem>>, vector<1x4x256xf32>
    %12 = vector.shape_cast %11 : vector<1x4x256xf32> to vector<4x256xf32>
    %13 = arith.mulf %10, %12 : vector<4x256xf32>
    %14 = arith.addf %9, %13 : vector<4x256xf32>
    %c16_i32 = arith.constant 16 : i32
    %15 = tpu.dynamic_rotate %14 by %c16_i32 dim 1 : vector<4x256xf32>, i32 -> vector<4x256xf32>
    %c3 = arith.constant 3 : index
    %c0_9 = arith.constant 0 : index
    %c0_10 = arith.constant 0 : index
    %16 = vector.load %arg2[%c3, %c0_9, %c0_10] : memref<6x4x256xf32, #tpu.memory_space<vmem>>, vector<1x4x256xf32>
    %17 = vector.shape_cast %16 : vector<1x4x256xf32> to vector<4x256xf32>
    %18 = arith.mulf %15, %17 : vector<4x256xf32>
    %c4 = arith.constant 4 : index
    %c0_11 = arith.constant 0 : index
    %c0_12 = arith.constant 0 : index
    %19 = vector.load %arg2[%c4, %c0_11, %c0_12] : memref<6x4x256xf32, #tpu.memory_space<vmem>>, vector<1x4x256xf32>
    %20 = vector.shape_cast %19 : vector<1x4x256xf32> to vector<4x256xf32>
    %21 = arith.mulf %14, %20 : vector<4x256xf32>
    %22 = arith.addf %18, %21 : vector<4x256xf32>
    %c240_i32 = arith.constant 240 : i32
    %23 = tpu.dynamic_rotate %14 by %c240_i32 dim 1 : vector<4x256xf32>, i32 -> vector<4x256xf32>
    %c5 = arith.constant 5 : index
    %c0_13 = arith.constant 0 : index
    %c0_14 = arith.constant 0 : index
    %24 = vector.load %arg2[%c5, %c0_13, %c0_14] : memref<6x4x256xf32, #tpu.memory_space<vmem>>, vector<1x4x256xf32>
    %25 = vector.shape_cast %24 : vector<1x4x256xf32> to vector<4x256xf32>
    %26 = arith.mulf %23, %25 : vector<4x256xf32>
    %27 = arith.addf %22, %26 : vector<4x256xf32>
    %c0_15 = arith.constant 0 : index
    %c0_16 = arith.constant 0 : index
    %28 = vector.load %arg4[%c0_15, %c0_16] : memref<4x1xf32, #tpu.memory_space<vmem>>, vector<4x1xf32>
    %29 = vector.broadcast %28 : vector<4x1xf32> to vector<4x256xf32>
    %30 = arith.addf %27, %29 : vector<4x256xf32>
    %cst = arith.constant 0.000000e+00 : f32
    %31 = vector.broadcast %cst : f32 to vector<4x256xf32>
    %32 = arith.maximumf %30, %31 : vector<4x256xf32>
    %c0_17 = arith.constant 0 : index
    %c0_18 = arith.constant 0 : index
    %33 = vector.load %arg3[%c0_17, %c0_18] : memref<8x4xf32, #tpu.memory_space<vmem>>, vector<8x4xf32>
    %cst_19 = arith.constant dense<0.000000e+00> : vector<8x256xf32>
    %34 = tpu.matmul %33, %32, %cst_19 {dimension_numbers = #tpu.dot_dimension_numbers<[1], [0], [0], [1], [0, 0, 1, 1], [], []>} : vector<8x4xf32>, vector<4x256xf32>, vector<8x256xf32> -> vector<8x256xf32>
    %c0_20 = arith.constant 0 : index
    %c0_21 = arith.constant 0 : index
    %35 = vector.load %arg5[%c0_20, %c0_21] : memref<8x1xf32, #tpu.memory_space<vmem>>, vector<8x1xf32>
    %36 = vector.broadcast %35 : vector<8x1xf32> to vector<8x256xf32>
    %37 = arith.addf %34, %36 : vector<8x256xf32>
    %cst_22 = arith.constant 0.000000e+00 : f32
    %38 = vector.broadcast %cst_22 : f32 to vector<8x256xf32>
    %39 = arith.maximumf %37, %38 : vector<8x256xf32>
    %c0_23 = arith.constant 0 : index
    %c0_24 = arith.constant 0 : index
    %c0_25 = arith.constant 0 : index
    %40 = vector.load %arg6[%c0_23, %c0_24, %c0_25] : memref<1x8x256xf32, #tpu.memory_space<vmem>>, vector<1x8x256xf32>
    %41 = vector.shape_cast %40 : vector<1x8x256xf32> to vector<8x256xf32>
    %42 = vector.shape_cast %39 : vector<8x256xf32> to vector<1x8x256xf32>
    tpu.vector_store %arg6[%c0_23, %c0_24, %c0_25], %42 {strides = array<i32>} : memref<1x8x256xf32, #tpu.memory_space<vmem>>, vector<1x8x256xf32>,
    return
  }
  func.func @transform_0(%arg0: i32) -> (i32, i32, i32) {
    %c0_i32 = arith.constant 0 : i32
    %c0_i32_0 = arith.constant 0 : i32
    %c0_i32_1 = arith.constant 0 : i32
    return %arg0, %c0_i32, %c0_i32_0 : i32, i32, i32
  }
  func.func @transform_1(%arg0: i32) -> (i32, i32, i32) {
    %c0_i32 = arith.constant 0 : i32
    %c0_i32_0 = arith.constant 0 : i32
    %c0_i32_1 = arith.constant 0 : i32
    %c0_i32_2 = arith.constant 0 : i32
    return %c0_i32, %c0_i32_0, %c0_i32_1 : i32, i32, i32
  }
  func.func @transform_2(%arg0: i32) -> (i32, i32) {
    %c0_i32 = arith.constant 0 : i32
    %c0_i32_0 = arith.constant 0 : i32
    %c0_i32_1 = arith.constant 0 : i32
    return %c0_i32, %c0_i32_0 : i32, i32
  }
  func.func @transform_3(%arg0: i32) -> (i32, i32) {
    %c0_i32 = arith.constant 0 : i32
    %c0_i32_0 = arith.constant 0 : i32
    %c0_i32_1 = arith.constant 0 : i32
    return %c0_i32, %c0_i32_0 : i32, i32
  }
  func.func @transform_4(%arg0: i32) -> (i32, i32) {
    %c0_i32 = arith.constant 0 : i32
    %c0_i32_0 = arith.constant 0 : i32
    %c0_i32_1 = arith.constant 0 : i32
    return %c0_i32, %c0_i32_0 : i32, i32
  }
  func.func @transform_5(%arg0: i32) -> (i32, i32, i32) {
    %c0_i32 = arith.constant 0 : i32
    %c0_i32_0 = arith.constant 0 : i32
    %c0_i32_1 = arith.constant 0 : i32
    return %arg0, %c0_i32, %c0_i32_0 : i32, i32, i32
  }
}

</mosaic_0001>

<llo_original>
// kernel: tpu_custom_call.1
$region0: #{tpu_custom_call.1}
  #allocation0 [shape = 'u32[]', space=smem, size = 0x4, offset = 0x4, fixed_abs, tag = 'smem constant byte address 0x4 - core index']
  #allocation1 [shape = 'u32[144,128]{1,0:T(1,128)}', space=vmem, size = 0x12000, scoped, tag = 'internal scratch']
  %s0 = inlined_call_operand.vmem [shape: f32[2,4,256], index: 0, kind: input, shape index: {}]
  %s1 = inlined_call_operand.hbm [shape: f32[6,4,256], index: 1, kind: input, shape index: {}]
  %s2 = inlined_call_operand.vmem [shape: f32[8,4], index: 2, kind: input, shape index: {}]
  %s3 = inlined_call_operand.vmem [shape: f32[4,1], index: 3, kind: input, shape index: {}]
  %s4 = inlined_call_operand.vmem [shape: f32[8,1], index: 4, kind: input, shape index: {}]
  %s5 = inlined_call_operand.hbm [shape: f32[2,8,256], index: 5, kind: output, shape index: {}]
  %s6 = sld [smem:[#allocation0]]
  $region57: #{tpu_custom_call.1} parent=0
    _
  %s8 = ssub.s32 1, %s6
  %s9 = scalar_select 0, %s8, %s6
  $region1: #{tpu_custom_call.1} parent=0
    #allocation2 [shape = 'u8[24576]{0}', space=vmem, size = 0x6000, scoped, tag = 'input window, operand 1, single buffered']
    #allocation3 [shape = 's32[2]{0}', space=sflag, size = 0x8, scoped, tag = 'scoped memory for tpu_custom_call.1']
    #allocation4 [shape = 's32[2]{0}', space=sflag, size = 0x8, scoped, tag = 'scoped memory for tpu_custom_call.1']
    #allocation5 [shape = 'u8[16384]{0}', space=vmem, size = 0x4000, scoped, tag = 'output window, operand 0']
    %10 = vsyncpa [#allocation3], 0
    %11 = vsyncpa [#allocation4], 0
    %s12 = scalar_lea.sflag [#allocation4], 1
    %13 = vsyncpa %s12, 0
    loop: start=0, step=1, limit=4
    $region2: #{tpu_custom_call.1} parent=1 // loop_pre_header
      _
    $region3: #{tpu_custom_call.1} parent=1 // loop_header
      %s15 = sphi 0, %s19
      %p16 = scmp.ge.s32.totalorder %s15, 4
      %s25 = sphi 0, %s27
      %s28 = sphi 0, %s25
      %s29 = sphi 0, %s28
      %s45 = sphi 0, %s29
      %s49 = sphi 0, %s49
      %s51 = sphi 0, %s49
      %s52 = sphi 0, %s51
      %s66 = sphi 0, %s52
      %s70 = sphi 0, %s70
      %s72 = sphi 0, %s70
      %s73 = sphi 0, %s72
      %s87 = sphi 0, %s73
      %s91 = sphi 0, %s91
      %s93 = sphi 0, %s91
      %s94 = sphi 0, %s93
      %s108 = sphi 0, %s94
      %s112 = sphi 0, %s112
      %s114 = sphi 0, %s112
      %s115 = sphi 0, %s114
      %s129 = sphi 0, %s115
      %s135 = sphi 0, %s137
      %s138 = sphi 0, %s135
      %s139 = sphi 0, %s138
      %s155 = sphi 0, %s139
    $region4: #{tpu_custom_call.1} parent=1 // loop_header_branch
      %18 = sbr.rel (%p16) target = $region8
    $region5: #{tpu_custom_call.1} parent=1 // loop_body
      %s20 = ssub.s32 %s15, 1
      %s21 = ssub.s32 %s15, 2
      %s22 = sadd.s32 %s15, 1
      %s23 = ssub.s32 %s15, %s22
      %p24 = scmp.eq.s32.totalorder %s23, 0
      %s26 = sadd.s32 %s25, 1
      %s27 = scalar_select %p24, %s25, %s26
      %p30 = pneg %p24
      %p31 = scmp.eq.s32.totalorder %s15, 1
      %p32 = por %p30, %p31
      %p33 = scmp.ne.s32.totalorder %s25, %s28
      %p34 = scmp.eq.s32.totalorder %s15, 0
      %p35 = por %p33, %p34
      %p36 = scmp.ne.s32.totalorder %s25, %s28
      %p37 = scmp.eq.s32.totalorder %s20, 1
      %p38 = por %p36, %p37
      %p39 = scmp.ne.s32.totalorder %s28, %s29
      %p40 = scmp.eq.s32.totalorder %s20, 0
      %p41 = por %p39, %p40
      %p42 = scmp.ne.s32.totalorder %s28, %s29
      %p43 = scmp.eq.s32.totalorder %s21, 1
      %p44 = por %p42, %p43
      %p46 = scmp.ne.s32.totalorder %s29, %s45
      %p47 = scmp.eq.s32.totalorder %s21, 0
      %p48 = por %p46, %p47
      %s50 = sadd.s32 %s49, 1
      %p53 = scmp.eq.s32.totalorder %s15, 1
      %p54 = scmp.ne.s32.totalorder %s49, %s51
      %p55 = scmp.eq.s32.totalorder %s15, 0
      %p56 = por %p54, %p55
      %p57 = scmp.ne.s32.totalorder %s49, %s51
      %p58 = scmp.eq.s32.totalorder %s20, 1
      %p59 = por %p57, %p58
      %p60 = scmp.ne.s32.totalorder %s51, %s52
      %p61 = scmp.eq.s32.totalorder %s20, 0
      %p62 = por %p60, %p61
      %p63 = scmp.ne.s32.totalorder %s51, %s52
      %p64 = scmp.eq.s32.totalorder %s21, 1
      %p65 = por %p63, %p64
      %p67 = scmp.ne.s32.totalorder %s52, %s66
      %p68 = scmp.eq.s32.totalorder %s21, 0
      %p69 = por %p67, %p68
      %s71 = sadd.s32 %s70, 1
      %p74 = scmp.eq.s32.totalorder %s15, 1
      %p75 = scmp.ne.s32.totalorder %s70, %s72
      %p76 = scmp.eq.s32.totalorder %s15, 0
      %p77 = por %p75, %p76
      %p78 = scmp.ne.s32.totalorder %s70, %s72
      %p79 = scmp.eq.s32.totalorder %s20, 1
      %p80 = por %p78, %p79
      %p81 = scmp.ne.s32.totalorder %s72, %s73
      %p82 = scmp.eq.s32.totalorder %s20, 0
      %p83 = por %p81, %p82
      %p84 = scmp.ne.s32.totalorder %s72, %s73
      %p85 = scmp.eq.s32.totalorder %s21, 1
      %p86 = por %p84, %p85
      %p88 = scmp.ne.s32.totalorder %s73, %s87
      %p89 = scmp.eq.s32.totalorder %s21, 0
      %p90 = por %p88, %p89
      %s92 = sadd.s32 %s91, 1
      %p95 = scmp.eq.s32.totalorder %s15, 1
      %p96 = scmp.ne.s32.totalorder %s91, %s93
      %p97 = scmp.eq.s32.totalorder %s15, 0
      %p98 = por %p96, %p97
      %p99 = scmp.ne.s32.totalorder %s91, %s93
      %p100 = scmp.eq.s32.totalorder %s20, 1
      %p101 = por %p99, %p100
      %p102 = scmp.ne.s32.totalorder %s93, %s94
      %p103 = scmp.eq.s32.totalorder %s20, 0
      %p104 = por %p102, %p103
      %p105 = scmp.ne.s32.totalorder %s93, %s94
      %p106 = scmp.eq.s32.totalorder %s21, 1
      %p107 = por %p105, %p106
      %p109 = scmp.ne.s32.totalorder %s94, %s108
      %p110 = scmp.eq.s32.totalorder %s21, 0
      %p111 = por %p109, %p110
      %s113 = sadd.s32 %s112, 1
      %p116 = scmp.eq.s32.totalorder %s15, 1
      %p117 = scmp.ne.s32.totalorder %s112, %s114
      %p118 = scmp.eq.s32.totalorder %s15, 0
      %p119 = por %p117, %p118
      %p120 = scmp.ne.s32.totalorder %s112, %s114
      %p121 = scmp.eq.s32.totalorder %s20, 1
      %p122 = por %p120, %p121
      %p123 = scmp.ne.s32.totalorder %s114, %s115
      %p124 = scmp.eq.s32.totalorder %s20, 0
      %p125 = por %p123, %p124
      %p126 = scmp.ne.s32.totalorder %s114, %s115
      %p127 = scmp.eq.s32.totalorder %s21, 1
      %p128 = por %p126, %p127
      %p130 = scmp.ne.s32.totalorder %s115, %s129
      %p131 = scmp.eq.s32.totalorder %s21, 0
      %p132 = por %p130, %p131
      %s133 = ssub.s32 %s15, %s22
      %p134 = scmp.eq.s32.totalorder %s133, 0
      %s136 = sadd.s32 %s135, 1
      %s137 = scalar_select %p134, %s135, %s136
      %p140 = pneg %p134
      %p141 = scmp.eq.s32.totalorder %s15, 1
      %p142 = por %p140, %p141
      %p143 = scmp.ne.s32.totalorder %s135, %s138
      %p144 = scmp.eq.s32.totalorder %s15, 0
      %p145 = por %p143, %p144
      %p146 = scmp.ne.s32.totalorder %s135, %s138
      %p147 = scmp.eq.s32.totalorder %s20, 1
      %p148 = por %p146, %p147
      %p149 = scmp.ne.s32.totalorder %s138, %s139
      %p150 = scmp.eq.s32.totalorder %s20, 0
      %p151 = por %p149, %p150
      %p152 = scmp.ne.s32.totalorder %s138, %s139
      %p153 = scmp.eq.s32.totalorder %s21, 1
      %p154 = por %p152, %p153
      %p156 = scmp.ne.s32.totalorder %s139, %s155
      %p157 = scmp.eq.s32.totalorder %s21, 0
      %p158 = por %p156, %p157
      %p159 = scmp.le.s32.totalorder 1, %s15
      %p160 = scmp.lt.s32.totalorder %s15, 3
      %p161 = pnand %p159, %p160
      %p162 = pneg %p161
      // Predicated region
      $region9: #{tpu_custom_call.1} parent=5 // pred_check
        _
      $region10: #{tpu_custom_call.1} parent=5 // pred_check_branch
        %164 = sbr.rel (%p161) target = $region12
      $region11: #{tpu_custom_call.1} parent=5 // pred_region
        %s165 = ssub.s32 %s15, 1
        // Predicated region
        $region13: #{tpu_custom_call.1} parent=11 // pred_check
          %p166 = pneg %p62
        $region14: #{tpu_custom_call.1} parent=11 // pred_check_branch
          %168 = sbr.rel (%p166) target = $region16
        $region15: #{tpu_custom_call.1} parent=11 // pred_region
          %s170 = ssub.s32 768, 768
          %171 = vsyncadd [#allocation3], %s170
          %s172 = sshll.u32 [#allocation2], 4
          %s173 = int_to_ptr.vmem [resolvable:$true] %s172
          %178 = dma.hbm_to_vmem [thread:$0]  %s1, 768, %s173, [#allocation3], 128, 128, 8
        $region16: #{tpu_custom_call.1} parent=11 // pred_fallthru
          _
        // Predicated region
        $region17: #{tpu_custom_call.1} parent=11 // pred_check
          %p179 = pneg %p83
        $region18: #{tpu_custom_call.1} parent=11 // pred_check_branch
          %181 = sbr.rel (%p179) target = $region20
        $region19: #{tpu_custom_call.1} parent=11 // pred_region
          _
        $region20: #{tpu_custom_call.1} parent=11 // pred_fallthru
          _
        // Predicated region
        $region21: #{tpu_custom_call.1} parent=11 // pred_check
          %p182 = pneg %p104
        $region22: #{tpu_custom_call.1} parent=11 // pred_check_branch
          %184 = sbr.rel (%p182) target = $region24
        $region23: #{tpu_custom_call.1} parent=11 // pred_region
          _
        $region24: #{tpu_custom_call.1} parent=11 // pred_fallthru
          _
        // Predicated region
        $region25: #{tpu_custom_call.1} parent=11 // pred_check
          %p185 = pneg %p125
        $region26: #{tpu_custom_call.1} parent=11 // pred_check_branch
          %187 = sbr.rel (%p185) target = $region28
        $region27: #{tpu_custom_call.1} parent=11 // pred_region
          _
        $region28: #{tpu_custom_call.1} parent=11 // pred_fallthru
          _
      $region12: #{tpu_custom_call.1} parent=5 // pred_fallthru
        _
      %p188 = scmp.lt.s32.totalorder %s15, 2
      // Predicated region
      $region29: #{tpu_custom_call.1} parent=5 // pred_check
        %p189 = pneg %p188
      $region30: #{tpu_custom_call.1} parent=5 // pred_check_branch
        %191 = sbr.rel (%p189) target = $region32
      $region31: #{tpu_custom_call.1} parent=5 // pred_region
        // Predicated region
        $region33: #{tpu_custom_call.1} parent=31 // pred_check
          %p192 = pneg %p35
        $region34: #{tpu_custom_call.1} parent=31 // pred_check_branch
          %194 = sbr.rel (%p192) target = $region36
        $region35: #{tpu_custom_call.1} parent=31 // pred_region
          %p195 = scmp.lt.s32.totalorder %s15, 1
          %s196 = scalar_select %p195, %s15, 1
          %s197 = smul.addr %s196, 2
          %s198 = smul.addr %s197, 4
          %s199 = scalar_lea.vmem %s0, %s198
        $region36: #{tpu_custom_call.1} parent=31 // pred_fallthru
          _
      $region32: #{tpu_custom_call.1} parent=5 // pred_fallthru
        _
      %p200 = scmp.le.s32.totalorder 1, %s15
      %p201 = scmp.lt.s32.totalorder %s15, 3
      %p202 = pnand %p200, %p201
      %p203 = pneg %p202
      // Predicated region
      $region37: #{tpu_custom_call.1} parent=5 // pred_check
        _
      $region38: #{tpu_custom_call.1} parent=5 // pred_check_branch
        %205 = sbr.rel (%p202) target = $region40
      $region39: #{tpu_custom_call.1} parent=5 // pred_region
        %s206 = ssub.s32 %s15, 1
        // Predicated region
        $region41: #{tpu_custom_call.1} parent=39 // pred_check
          %p207 = pneg %p62
        $region42: #{tpu_custom_call.1} parent=39 // pred_check_branch
          %209 = sbr.rel (%p207) target = $region44
        $region43: #{tpu_custom_call.1} parent=39 // pred_region
          %210 = dma.done [#allocation3], 768
        $region44: #{tpu_custom_call.1} parent=39 // pred_fallthru
          _
        %p211 = scmp.lt.s32.totalorder %s20, 1
        %s212 = scalar_select %p211, %s20, 1
        %s213 = smul.addr %s212, 2
        %s214 = smul.addr %s213, 4
        %s215 = scalar_lea.vmem %s0, %s214
        %p216 = pneg %p41
        %p217 = pneg %p38
        %p218 = pneg %p62
        %p219 = pneg %p59
        %p220 = pneg %p83
        %p221 = pneg %p80
        %p222 = pneg %p104
        %p223 = pneg %p101
        %p224 = pneg %p125
        %p225 = pneg %p122
        %p226 = pneg %p151
        %p227 = pneg %p148
        %s228 = sand.u32 %s138, 1
        %s229 = scalar_lea.sflag [#allocation4], %s228
        %s230 = sand.u32 %s138, 1
        %s231 = smul.addr %s230, 16
        %s232 = scalar_lea.vmem [#allocation5], %s231
        %p233 = scmp.lt.s32.totalorder %s20, 1
        %s234 = scalar_select %p233, %s20, 1
        %s235 = smul.addr %s234, 2
        %s236 = smul.addr %s235, 4
        %s237 = scalar_lea.vmem %s0, %s236
        %v238 = vld [vmem:[%s237] sm:$0xff]
        %v240 = vcombine.high %v238, %v238
        %242 = vrot.lane.b32.xlu0 %v238, 1
        %v243 = vpop.permute.xlu0 %242
        %244 = vrot.lane.b32.xlu0 %v240, 1
        %v245 = vpop.permute.xlu0 %244
        %v246 = vlaneseq
        %v247 = vand.u32 %v246, 127
        %vm248 = vcmp.lt.s32.totalorder %v247, 1
        %v249 = vsel %vm248, %v243, %v245
        %v250 = vsel %vm248, %v245, %v243
        %v251 = vld [vmem:[#allocation2] sm:$0xff]
        %v253 = vcombine.high %v251, %v251
        %v255 = vmul.f32 %v250, %v251
        %v256 = vmul.f32 %v249, %v253
        %s257 = scalar_lea.vmem [#allocation2], 8
        %v258 = vld [vmem:[%s257] sm:$0xff]
        %v259 = vmul.f32 %v238, %v258
        %v261 = vcombine.high %v259, %v259
        %v263 = vadd.f32 %v255, %v259
        %v264 = vadd.f32 %v256, %v261
        %265 = vrot.lane.b32.xlu0 %v238, 127
        %v266 = vpop.permute.xlu0 %265
        %267 = vrot.lane.b32.xlu0 %v240, 127
        %v268 = vpop.permute.xlu0 %267
        %vm269 = vcmp.lt.s32.totalorder %v247, 127
        %v270 = vsel %vm269, %v266, %v268
        %v271 = vsel %vm269, %v268, %v266
        %s272 = scalar_lea.vmem [#allocation2], 16
        %v273 = vld [vmem:[%s272] sm:$0xff]
        %v275 = vcombine.high %v273, %v273
        %v277 = vmul.f32 %v270, %v273
        %v278 = vmul.f32 %v271, %v275
        %v279 = vadd.f32 %v263, %v277
        %v280 = vadd.f32 %v264, %v278
        %281 = vrot.lane.b32.xlu0 %v279, 16
        %v282 = vpop.permute.xlu0 %281
        %283 = vrot.lane.b32.xlu0 %v280, 16
        %v284 = vpop.permute.xlu0 %283
        %vm285 = vcmp.lt.s32.totalorder %v247, 16
        %v286 = vsel %vm285, %v282, %v284
        %v287 = vsel %vm285, %v284, %v282
        %s288 = scalar_lea.vmem [#allocation2], 24
        %v289 = vld [vmem:[%s288] sm:$0xff]
        %v291 = vcombine.high %v289, %v289
        %v293 = vmul.f32 %v287, %v289
        %v294 = vmul.f32 %v286, %v291
        %s295 = scalar_lea.vmem [#allocation2], 32
        %v296 = vld [vmem:[%s295] sm:$0xff]
        %v298 = vcombine.high %v296, %v296
        %v300 = vmul.f32 %v279, %v296
        %v301 = vmul.f32 %v280, %v298
        %v302 = vadd.f32 %v293, %v300
        %v303 = vadd.f32 %v294, %v301
        %304 = vrot.lane.b32.xlu0 %v279, 112
        %v305 = vpop.permute.xlu0 %304
        %306 = vrot.lane.b32.xlu0 %v280, 112
        %v307 = vpop.permute.xlu0 %306
        %vm308 = vcmp.lt.s32.totalorder %v247, 112
        %v309 = vsel %vm308, %v305, %v307
        %v310 = vsel %vm308, %v307, %v305
        %s311 = scalar_lea.vmem [#allocation2], 40
        %v312 = vld [vmem:[%s311] sm:$0xff]
        %v314 = vcombine.high %v312, %v312
        %v316 = vmul.f32 %v309, %v312
        %v317 = vmul.f32 %v310, %v314
        %v318 = vadd.f32 %v302, %v316
        %v319 = vadd.f32 %v303, %v317
        %v320 = vld [vmem:[%s3] sm:$0xf]
        %322 = vset.pattern.permute.xlu0 0
        %323 = vperm.xlu0 %322, %v320
        %v324 = vpop.permute.xlu0 %323
        %v326 = vadd.f32 %v318, %v324
        %v327 = vadd.f32 %v319, %v324
        %v328 = vmax.f32 %v326, 0.0
        %v329 = vmax.f32 %v327, 0.0
        %v330 = vld [vmem:[%s2] sm:$0xff]
        %v331 = vld [vmem:[%s4] sm:$0xff]
        %333 = vset.pattern.permute.xlu0 0
        %334 = vperm.xlu0 %333, %v331
        %v335 = vpop.permute.xlu0 %334
        %vm337 = vcmask 31744
        %v339 = vsel %vm337, %v330, 0
        %vm341 = vcmask 1043456
        %v343 = vsel %vm341, %v328, 0
        %v346 = vsel %vm341, %v329, 0
        %348 = vmatprep.subr.mxu0 %v346
        %349 = vmatpush1.msra.mxu0 %v343
        %350 = vmatprep.subr.mxu0 0.0
        %351 = vmatpush1.msra.mxu0 0.0
        %352 = vmatprep.subr.mxu0 0.0
        %353 = vmatpush1.msra.mxu0 0.0
        %354 = vmatprep.subr.mxu0 0.0
        %355 = vmatpush1.msra.mxu0 0.0
        %356 = vmatprep.subr.mxu0 0.0
        %357 = vmatpush1.msra.mxu0 0.0
        %358 = vmatprep.subr.mxu0 0.0
        %359 = vmatpush1.msra.mxu0 0.0
        %360 = vmatprep.subr.mxu0 0.0
        %361 = vmatpush1.msra.mxu0 0.0
        %362 = vmatprep.subr.mxu0 0.0
        %363 = vmatpush1.msra.mxu0 0.0
        %364 = vmatprep.subr.mxu0 0.0
        %365 = vmatpush1.msra.mxu0 0.0
        %366 = vmatprep.subr.mxu0 0.0
        %367 = vmatpush1.msra.mxu0 0.0
        %368 = vmatprep.subr.mxu0 0.0
        %369 = vmatpush1.msra.mxu0 0.0
        %370 = vmatprep.subr.mxu0 0.0
        %371 = vmatpush1.msra.mxu0 0.0
        %372 = vmatprep.subr.mxu0 0.0
        %373 = vmatpush1.msra.mxu0 0.0
        %374 = vmatprep.subr.mxu0 0.0
        %375 = vmatpush1.msra.mxu0 0.0
        %376 = vmatprep.subr.mxu0 0.0
        %377 = vmatpush1.msra.mxu0 0.0
        %378 = vmatprep.subr.mxu0 0.0
        %379 = vmatpush1.msra.mxu0 0.0
        %380 = vmatprep.subr.mxu0 0.0
        %381 = vmatpush1.msra.mxu0 0.0
        %382 = vmatprep.subr.mxu0 0.0
        %383 = vmatpush1.msra.mxu0 0.0
        %384 = vmatprep.subr.mxu0 0.0
        %385 = vmatpush1.msra.mxu0 0.0
        %386 = vmatprep.subr.mxu0 0.0
        %387 = vmatpush1.msra.mxu0 0.0
        %388 = vmatprep.subr.mxu0 0.0
        %389 = vmatpush1.msra.mxu0 0.0
        %390 = vmatprep.subr.mxu0 0.0
        %391 = vmatpush1.msra.mxu0 0.0
        %392 = vmatprep.subr.mxu0 0.0
        %393 = vmatpush1.msra.mxu0 0.0
        %394 = vmatprep.subr.mxu0 0.0
        %395 = vmatpush1.msra.mxu0 0.0
        %396 = vmatprep.subr.mxu0 0.0
        %397 = vmatpush1.msra.mxu0 0.0
        %398 = vmatprep.subr.mxu0 0.0
        %399 = vmatpush1.msra.mxu0 0.0
        %400 = vmatprep.subr.mxu0 0.0
        %401 = vmatpush1.msra.mxu0 0.0
        %402 = vmatprep.subr.mxu0 0.0
        %403 = vmatpush1.msra.mxu0 0.0
        %404 = vmatprep.subr.mxu0 0.0
        %405 = vmatpush1.msra.mxu0 0.0
        %406 = vmatprep.subr.mxu0 0.0
        %407 = vmatpush1.msra.mxu0 0.0
        %408 = vmatprep.subr.mxu0 0.0
        %409 = vmatpush1.msra.mxu0 0.0
        %410 = vmatprep.subr.mxu0 0.0
        %411 = vmatpush1.msra.mxu0 0.0
        %412 = vmatprep.mubr.f32.mxu0 0.0
        %413 = vmatmul.mubr.f32.gmra.mrb[0].mxu0 %v339
        %v414 = vpop.f32.mrb[0].mxu0
        %v415 = vadd.f32 %v335, %v414
        %v416 = vpop.f32.mrb[0].mxu0
        %v417 = vadd.f32 %v335, %v416
        %418 = vdwg.mxu0
        %v419 = vmax.f32 %v415, 0.0
        %v420 = vmax.f32 %v417, 0.0
        %421 = vst [vmem:[%s232] sm:$0xff] %v419
        %422 = vst [vmem:[%s232 + $0x8] sm:$0xff] %v420
        %s423 = sand.u32 %s138, 1
        %s424 = scalar_lea.sflag [#allocation4], %s423
        %s425 = sand.u32 %s138, 1
        %s426 = smul.addr %s425, 16
        %s427 = scalar_lea.vmem [#allocation5], %s426
        // Predicated region
        $region45: #{tpu_custom_call.1} parent=39 // pred_check
          %p428 = pneg %p148
        $region46: #{tpu_custom_call.1} parent=39 // pred_check_branch
          %430 = sbr.rel (%p428) target = $region48
        $region47: #{tpu_custom_call.1} parent=39 // pred_region
          %s432 = ssub.s32 256, 256
          %433 = vsyncadd %s424, %s432
          %s434 = smul.addr %s20, 2
          %s435 = smul.addr %s434, 128
          %s436 = scalar_lea.hbm %s5, %s435
          %s438 = sshll.u32 %s427, 4
          %s439 = int_to_ptr.vmem [resolvable:$true] %s438
          %441 = dma.vmem_to_hbm [thread:$0]  %s439, 256, %s436, %s424
        $region48: #{tpu_custom_call.1} parent=39 // pred_fallthru
          _
      $region40: #{tpu_custom_call.1} parent=5 // pred_fallthru
        _
      %p442 = scmp.le.s32.totalorder 2, %s15
      // Predicated region
      $region49: #{tpu_custom_call.1} parent=5 // pred_check
        %p443 = pneg %p442
      $region50: #{tpu_custom_call.1} parent=5 // pred_check_branch
        %445 = sbr.rel (%p443) target = $region52
      $region51: #{tpu_custom_call.1} parent=5 // pred_region
        %s446 = ssub.s32 %s15, 2
        // Predicated region
        $region53: #{tpu_custom_call.1} parent=51 // pred_check
          %p447 = pneg %p154
        $region54: #{tpu_custom_call.1} parent=51 // pred_check_branch
          %449 = sbr.rel (%p447) target = $region56
        $region55: #{tpu_custom_call.1} parent=51 // pred_region
          %s450 = sand.u32 %s139, 1
          %s451 = scalar_lea.sflag [#allocation4], %s450
          %s452 = sand.u32 %s139, 1
          %s453 = smul.addr %s452, 16
          %s454 = scalar_lea.vmem [#allocation5], %s453
          %455 = dma.done %s451, 256
        $region56: #{tpu_custom_call.1} parent=51 // pred_fallthru
          _
      $region52: #{tpu_custom_call.1} parent=5 // pred_fallthru
        _
    $region6: #{tpu_custom_call.1} parent=1 // loop_footer
      %s19 = sadd.s32 1, %s15
    $region7: #{tpu_custom_call.1} parent=1 // loop_footer_branch
      %14 = sbr.rel target = $region3
    $region8: #{tpu_custom_call.1} parent=1 // loop_exit
      _
    %456 = vsyncpa [#allocation3], 1
    %s457 = scalar_lea.sflag [#allocation3], 1
    %458 = vsyncpa %s457, 1
    %459 = vsyncpa [#allocation4], 1
    %s460 = scalar_lea.sflag [#allocation4], 1
    %461 = vsyncpa %s460, 1

</llo_original>
